<compile_context>
chip_gen: v5e
topology: v5e:2x2
jax: 0.10.0
libtpu: 0.0.40
codegen_flags: <defaults>
</compile_context>

<pallas_src>
import functools

import jax
import jax.numpy as jnp
from jax import lax
from jax.experimental import pallas as pl
from jax.experimental.pallas import tpu as pltpu


def _gem_kernel(x_ref, o_ref, *, p, inv_p, eps, p_is_int, inv_hw):
    # x_ref: (TILE_R, H*W) block in VMEM; o_ref: (TILE_R, 1)
    x = x_ref[...]
    # Clamp in the input dtype (bf16 stays bf16 on v6e/v7x VPU; f32 unchanged).
    xc = jnp.maximum(x, jnp.asarray(eps, dtype=x.dtype))
    if p_is_int:
        # Integer power -> VPU multiplies only; keeps the single EUP slot free.
        xp = lax.integer_pow(xc, int(round(p)))
    else:
        # Generic float exponent (exp/log on EUP).
        xp = xc.astype(jnp.float32) ** jnp.float32(p)
    # Full-spatial mean along lanes, accumulated in f32.
    s = jnp.sum(xp, axis=-1, keepdims=True, dtype=jnp.float32)
    m = s * jnp.float32(inv_hw)
    # Root only on the (TILE_R, 1) result -> negligible EUP work.
    o_ref[...] = (m ** jnp.float32(inv_p)).astype(o_ref.dtype)


def gem_pallas(x, p=3.0, eps=1e-6, *, max_tile_rows=None):
    """GeM pooling. x: (N, C, H, W) -> (N, C, 1, 1)."""
    N, C, H, W = x.shape
    rows = N * C
    hw = H * W
    x2 = x.reshape(rows, hw)

    itemsize = jnp.dtype(x2.dtype).itemsize
    # Sublane granularity: 8 for 4-byte, 16 for 2-byte, 32 for 1-byte dtypes.
    sublane = max(8, 32 // max(itemsize, 1))
    # Real VMEM lane footprint is padded to full 128-lane vregs.
    padded_hw = pl.cdiv(hw, 128) * 128

    # Per-row VMEM bytes of one pipeline stage: lane-padded input row plus the
    # (row, 1) output element padded to one lane-tile.  Both are double
    # buffered by the auto-pipeline, so total ~= 2 * tile_r * per_row_bytes.
    per_row_bytes = (padded_hw + 128) * itemsize
    budget_bytes = 24 * 1024 * 1024            # leaves headroom under the 32 MiB limit
    max_tile_r = (budget_bytes // (2 * per_row_bytes)) // sublane * sublane
    max_tile_r = max(sublane, max_tile_r)
    if max_tile_rows is not None:              # test hook: force multi-tile path
        max_tile_r = min(max_tile_r, max(sublane, (max_tile_rows // sublane) * sublane))

    if rows <= max_tile_r:
        # Single block covering the whole rows axis (full-dim blocks are always
        # legal, even when `rows` is not a multiple of the sublane count).
        tile_r = rows
    else:
        tile_r = max_tile_r                    # multiple of `sublane` (>= 8)

    n_tiles = pl.cdiv(rows, tile_r)
    out_rows = n_tiles * tile_r                # output writes are always in-bounds

    p = float(p)
    p_is_int = p.is_integer()
    kernel = functools.partial(
        _gem_kernel, p=p, inv_p=1.0 / p, eps=float(eps),
        p_is_int=p_is_int, inv_hw=1.0 / hw)

    # Advisory cost hint: this is a pure HBM-bandwidth pass.
    cost = pl.CostEstimate(
        flops=5 * rows * hw,
        transcendentals=2 * rows + (0 if p_is_int else 2 * rows * hw),
        bytes_accessed=rows * hw * itemsize + rows * itemsize)

    out = pl.pallas_call(
        kernel,
        out_shape=jax.ShapeDtypeStruct((out_rows, 1), x.dtype),
        grid=(n_tiles,),
        in_specs=[pl.BlockSpec((tile_r, hw), lambda i: (i, 0))],
        out_specs=pl.BlockSpec((tile_r, 1), lambda i: (i, 0)),
        compiler_params=pltpu.CompilerParams(
            dimension_semantics=("parallel",),   # rows are independent; 2x on v7x
            vmem_limit_bytes=32 * 1024 * 1024,
        ),
        cost_estimate=cost,
    )(x2)

    return out[:rows].reshape(N, C, 1, 1)


class GeM:
    """JAX mirror of the PyTorch GeM module's forward pass."""

    def __init__(self, p=3, eps=1e-6, p_trainable=False):
        # p_trainable only affects gradient flow in PyTorch; forward math is
        # identical, so p is held as a plain float here.
        # TODO(synk): if p must change at runtime (trainable p), pass it via an
        # SMEM scalar-prefetch ref instead of closing over it.
        self.p = float(p)
        self.eps = float(eps)

    def __call__(self, x):
        return gem_pallas(x, p=self.p, eps=self.eps)


def _gem_ref(x, p, eps):
    # Pure-JAX reference (same math as F.avg_pool2d full-window path).
    return jnp.mean(jnp.maximum(x, eps) ** p, axis=(-2, -1), keepdims=True) ** (
        1.0 / p
    )


if __name__ == "__main__":
    key = jax.random.PRNGKey(0)

    # Primary test shape (as implied by the module).
    N, C, H, W = 2, 4, 16, 16
    x = jax.random.normal(key, (N, C, H, W), dtype=jnp.float32)

    mod = GeM(p=3, eps=1e-6, p_trainable=False)
    out = jax.block_until_ready(mod(x))
    ref = _gem_ref(x, 3.0, 1e-6)
    assert out.shape == (N, C, 1, 1)
    assert jnp.allclose(out, ref, atol=1e-5, rtol=1e-5)

    # Secondary check: odd rows / non-128-multiple spatial (backbone-like 7x7),
    # single-tile full-dim block path.
    key2 = jax.random.PRNGKey(1)
    x2 = jax.random.normal(key2, (3, 5, 7, 7), dtype=jnp.float32)
    out2 = jax.block_until_ready(mod(x2))
    ref2 = _gem_ref(x2, 3.0, 1e-6)
    assert out2.shape == (3, 5, 1, 1)
    assert jnp.allclose(out2, ref2, atol=1e-5, rtol=1e-5)

    # Third check: force the multi-tile path with a non-dividing last tile
    # (rows=15, tile=8 -> 2 grid steps, 1 overhang row discarded).
    out3 = jax.block_until_ready(
        gem_pallas(x2, p=3.0, eps=1e-6, max_tile_rows=8))
    assert out3.shape == (3, 5, 1, 1)
    assert jnp.allclose(out3, ref2, atol=1e-5, rtol=1e-5)

    print("KERNEL_OK")
</pallas_src>

<mosaic_0001>
module attributes {stable_mosaic.version = 11 : i64} {
  func.func @_gem_kernel(%arg0: i32, %arg1: memref<8x256xf32, #tpu.memory_space<vmem>>, %arg2: memref<8x1xf32, #tpu.memory_space<vmem>>) attributes {dimension_semantics = [#tpu.dimension_semantics<parallel>], iteration_bounds = array<i64: 1>, scalar_prefetch = 0 : i64, scratch_operands = 0 : i64, tpu.core_type = #tpu.core_type<tc>, window_params = [{transform_indices = @transform_0, window_bounds = array<i64: 8, 256>}, {transform_indices = @transform_1, window_bounds = array<i64: 8, 1>}]} {
    %c0 = arith.constant 0 : index
    %c0_0 = arith.constant 0 : index
    %0 = vector.load %arg1[%c0, %c0_0] : memref<8x256xf32, #tpu.memory_space<vmem>>, vector<8x256xf32>
    %cst = arith.constant 9.99999997E-7 : f32
    %1 = vector.broadcast %cst : f32 to vector<8x256xf32>
    %2 = arith.maximumf %0, %1 : vector<8x256xf32>
    %3 = arith.mulf %2, %2 : vector<8x256xf32>
    %4 = arith.mulf %2, %3 : vector<8x256xf32>
    %cst_1 = arith.constant dense<0.000000e+00> : vector<8xf32>
    %5 = vector.multi_reduction <add>, %4, %cst_1 [1] : vector<8x256xf32> to vector<8xf32>
    %6 = vector.shape_cast %5 : vector<8xf32> to vector<8x1xf32>
    %cst_2 = arith.constant 3.906250e-03 : f32
    %7 = vector.broadcast %cst_2 : f32 to vector<8x1xf32>
    %8 = arith.mulf %6, %7 : vector<8x1xf32>
    %cst_3 = arith.constant 0.333333343 : f32
    %9 = vector.broadcast %cst_3 : f32 to vector<8x1xf32>
    %10 = math.powf %8, %9 : vector<8x1xf32>
    %c0_4 = arith.constant 0 : index
    %c0_5 = arith.constant 0 : index
    %11 = vector.load %arg2[%c0_4, %c0_5] : memref<8x1xf32, #tpu.memory_space<vmem>>, vector<8x1xf32>
    tpu.vector_store %arg2[%c0_4, %c0_5], %10 {strides = array<i32>} : memref<8x1xf32, #tpu.memory_space<vmem>>, vector<8x1xf32>,
    return
  }
  func.func @transform_0(%arg0: i32) -> (i32, i32) {
    %c0_i32 = arith.constant 0 : i32
    %c0_i32_0 = arith.constant 0 : i32
    return %arg0, %c0_i32 : i32, i32
  }
  func.func @transform_1(%arg0: i32) -> (i32, i32) {
    %c0_i32 = arith.constant 0 : i32
    %c0_i32_0 = arith.constant 0 : i32
    return %arg0, %c0_i32 : i32, i32
  }
}

</mosaic_0001>

<llo_original>
// kernel: tpu_custom_call.1
$region0: #{tpu_custom_call.1}
  #allocation0 [shape = 'u32[]', space=smem, size = 0x4, offset = 0x4, fixed_abs, tag = 'smem constant byte address 0x4 - core index']
  #allocation1 [shape = 'u32[72,128]{1,0:T(1,128)}', space=vmem, size = 0x9000, scoped, tag = 'internal scratch']
  %s0 = inlined_call_operand.hbm [shape: f32[8,256], index: 0, kind: input, shape index: {}]
  %s1 = inlined_call_operand.vmem [shape: f32[8,1], index: 1, kind: output, shape index: {}]
  %s2 = sld [smem:[#allocation0]]
  $region18: #{tpu_custom_call.1} parent=0
    _
  %s4 = ssub.s32 1, %s2
  %s5 = scalar_select 0, %s4, %s2
  $region1: #{tpu_custom_call.1} parent=0
    #allocation2 [shape = 'u8[8192]{0}', space=vmem, size = 0x2000, scoped, tag = 'input window, operand 0, single buffered']
    #allocation3 [shape = 's32[1]{0}', space=sflag, size = 0x4, scoped, tag = 'scoped memory for tpu_custom_call.1']
    %6 = vsyncpa [#allocation3], 0
    // Predicated region
    $region2: #{tpu_custom_call.1} parent=1 // pred_check
      _
    $region3: #{tpu_custom_call.1} parent=1 // pred_check_branch
      %8 = sbr.rel (0) target = $region5
    $region4: #{tpu_custom_call.1} parent=1 // pred_region
      %10 = vsyncadd [#allocation3], 0
      %s12 = sshll.u32 %s0, 4
      %s13 = int_to_ptr.hbm [resolvable:$true] %s12
      %s14 = sshll.u32 [#allocation2], 4
      %s15 = int_to_ptr.vmem [resolvable:$true] %s14
      %17 = dma.hbm_to_vmem [thread:$0]  %s13, 256, %s15, [#allocation3]
    $region5: #{tpu_custom_call.1} parent=1 // pred_fallthru
      _
    // Predicated region
    $region6: #{tpu_custom_call.1} parent=1 // pred_check
      _
    $region7: #{tpu_custom_call.1} parent=1 // pred_check_branch
      %19 = sbr.rel (0) target = $region9
    $region8: #{tpu_custom_call.1} parent=1 // pred_region
      %21 = dma.done [#allocation3], 256
    $region9: #{tpu_custom_call.1} parent=1 // pred_fallthru
      _
    %v22 = vld [vmem:[#allocation2] sm:$0xff]
    %v23 = vld [vmem:[#allocation2 + $0x8] sm:$0xff]
    %v24 = vmax.f32 %v22, 1e-06
    %v25 = vmax.f32 %v23, 1e-06
    %v26 = vmul.f32 %v24, %v24
    %v27 = vmul.f32 %v25, %v25
    %v28 = vmul.f32 %v24, %v26
    %v29 = vmul.f32 %v25, %v27
    %v30 = vadd.f32 %v28, %v29
    %31 = vadd.xlane.f32.xlu0 %v30
    %v32 = vpop.xlane.xlu0 %31
    %v33 = vmul.f32 %v32, 0.00390625
    %v34 = vpow.f32 %v33, 0.33333334
    %vm35 = vcmask 7168
    %36 = vst.msk [vmem:[%s1] sm:$0xff] %vm35, %v34
    // Predicated region
    $region10: #{tpu_custom_call.1} parent=1 // pred_check
      _
    $region11: #{tpu_custom_call.1} parent=1 // pred_check_branch
      %38 = sbr.rel (0) target = $region13
    $region12: #{tpu_custom_call.1} parent=1 // pred_region
      _
    $region13: #{tpu_custom_call.1} parent=1 // pred_fallthru
      _
    // Predicated region
    $region14: #{tpu_custom_call.1} parent=1 // pred_check
      _
    $region15: #{tpu_custom_call.1} parent=1 // pred_check_branch
      %40 = sbr.rel (0) target = $region17
    $region16: #{tpu_custom_call.1} parent=1 // pred_region
      _
    $region17: #{tpu_custom_call.1} parent=1 // pred_fallthru
      _
    %41 = vsyncpa [#allocation3], 1

</llo_original>
